<compile_context>
chip_gen: v5e
topology: v5e:2x2
jax: 0.10.0
libtpu: 0.0.40
codegen_flags: <defaults>
</compile_context>

<pallas_src>
import math
import functools

import jax
import jax.numpy as jnp
from jax.experimental import pallas as pl
from jax.experimental.pallas import tpu as pltpu


# ----------------------------- Pallas kernel -------------------------------

def _taylor_kan_net_kernel(*refs, n_layers, order):
    # refs = (x_ref, w_big_0, bias_0, w_big_1, bias_1, ..., o_ref)
    #   x_ref:      (TB, in_0)                 f32 input tile
    #   w_big_l:    (order*in_l, out_l)        bf16 fused weights (base + Taylor p>=1)
    #   bias_l:     (1, out_l)                 f32 bias with the p=0 term folded in
    #   o_ref:      (TB, out_last)
    x_ref = refs[0]
    o_ref = refs[-1]

    h = x_ref[...].astype(jnp.float32)
    for l in range(n_layers):
        w_ref = refs[1 + 2 * l]
        b_ref = refs[2 + 2 * l]

        # elementwise path in f32 (VPU / EUP)
        silu = h * jax.nn.sigmoid(h)

        # X_big = [silu(h), h, h^2, ..., h^(order-1)]  -- x^0 already folded into bias
        parts = [silu.astype(jnp.bfloat16)]
        xp = h
        for pw in range(1, order):
            parts.append(xp.astype(jnp.bfloat16))
            if pw < order - 1:
                xp = xp * h
        xbig = parts[0] if len(parts) == 1 else jnp.concatenate(parts, axis=-1)

        # single MXU matmul per layer, f32 accumulation
        h = jnp.dot(xbig, w_ref[...], preferred_element_type=jnp.float32) + b_ref[...]

    o_ref[...] = h.astype(o_ref.dtype)


def _pick_tb(batch):
    """Batch tile: multiple of 8, aim for >=2 grid steps (v7x megacore), cap 512."""
    bp8 = ((batch + 7) // 8) * 8
    if bp8 <= 8:
        return 8
    half = ((bp8 // 2 + 7) // 8) * 8
    return max(8, min(512, half))


def taylor_kan_forward(x, kernel_params, *, order, tb=None):
    """x: (..., in_features). kernel_params: list of {'w_big': (order*in, out) bf16,
    'bias': (1, out) f32} produced by prepare_kernel_params()."""
    orig_shape = x.shape
    x2d = x.reshape(-1, orig_shape[-1]).astype(jnp.float32)
    B, in_f = x2d.shape
    out_f = kernel_params[-1]["w_big"].shape[1]
    n_layers = len(kernel_params)

    if tb is None:
        tb = _pick_tb(B)
    Bp = pl.cdiv(B, tb) * tb
    if Bp != B:
        x2d = jnp.pad(x2d, ((0, Bp - B), (0, 0)))

    in_specs = [pl.BlockSpec((tb, in_f), lambda i: (i, 0))]
    args = [x2d]
    for p in kernel_params:
        kin, kout = p["w_big"].shape
        # full-array blocks with constant index_map -> weights stay resident in VMEM
        in_specs.append(pl.BlockSpec((kin, kout), lambda i: (0, 0)))
        in_specs.append(pl.BlockSpec((1, kout), lambda i: (0, 0)))
        args.append(p["w_big"])
        args.append(p["bias"])

    kernel = functools.partial(_taylor_kan_net_kernel, n_layers=n_layers, order=order)
    out = pl.pallas_call(
        kernel,
        out_shape=jax.ShapeDtypeStruct((Bp, out_f), jnp.float32),
        grid_spec=pltpu.PrefetchScalarGridSpec(
            num_scalar_prefetch=0,
            grid=(Bp // tb,),
            in_specs=in_specs,
            out_specs=pl.BlockSpec((tb, out_f), lambda i: (i, 0)),
        ),
        compiler_params=pltpu.CompilerParams(
            dimension_semantics=("parallel",)),
    )(*args)

    return out[:B].reshape(*orig_shape[:-1], out_f)


# ----------------------------- Parameter setup ------------------------------

def init_taylor_kan_params(key, layers_hidden, order, scale_base, scale_taylor):
    """Raw (torch-layout) parameters, mimicking TaylorKANLinear.reset_parameters()."""
    raw = []
    for in_f, out_f in zip(layers_hidden, layers_hidden[1:]):
        key, k1, k2, k3 = jax.random.split(key, 4)
        # kaiming_uniform_(a=sqrt(5)*scale_base): bound = sqrt(6 / ((1+a^2) * fan_in))
        a = math.sqrt(5) * scale_base
        bound_w = math.sqrt(6.0 / ((1.0 + a * a) * in_f))
        base_weight = jax.random.uniform(k1, (out_f, in_f), jnp.float32,
                                         minval=-bound_w, maxval=bound_w)
        # taylor coeffs ~ N(0, std), std = scale_taylor / (in * sqrt(order))
        std = scale_taylor / (in_f * math.sqrt(order))
        taylor_coeffs = std * jax.random.normal(k2, (out_f, in_f, order), jnp.float32)
        # bias ~ U(-1/sqrt(fan_in), 1/sqrt(fan_in))
        bound_b = 1.0 / math.sqrt(in_f)
        bias = jax.random.uniform(k3, (out_f,), jnp.float32,
                                  minval=-bound_b, maxval=bound_b)
        raw.append({"base_weight": base_weight,
                    "taylor_coeffs": taylor_coeffs,
                    "bias": bias})
    return raw


def prepare_kernel_params(raw_params, order):
    """Host-side fusion: fold the x^0 Taylor term into the bias and concatenate
    base weight + Taylor coefficient matrices (p >= 1) into one (order*in, out)
    bf16 operand per layer."""
    params = []
    for p in raw_params:
        W = p["base_weight"]          # (out, in)
        C = p["taylor_coeffs"]        # (out, in, order)
        b = p["bias"]                 # (out,)
        blocks = [W.T] + [C[:, :, pw].T for pw in range(1, order)]
        w_big = jnp.concatenate(blocks, axis=0).astype(jnp.bfloat16)   # (order*in, out)
        bias_folded = (b + C[:, :, 0].sum(axis=1)).reshape(1, -1).astype(jnp.float32)
        params.append({"w_big": w_big, "bias": bias_folded})
    return params


# ----------------------------- Reference (plain JAX, f32) --------------------

def taylor_kan_forward_ref(x, raw_params, *, order):
    """Faithful f32 re-implementation of the torch forward pass (un-fused)."""
    orig_shape = x.shape
    h = x.reshape(-1, orig_shape[-1]).astype(jnp.float32)
    for p in raw_params:
        W = p["base_weight"]          # (out, in)
        C = p["taylor_coeffs"]        # (out, in, order)
        b = p["bias"]
        base = (h * jax.nn.sigmoid(h)) @ W.T
        tay = jnp.zeros((h.shape[0], W.shape[0]), jnp.float32)
        xp = jnp.ones_like(h)         # x**0 == 1 (matches torch 0**0 == 1)
        for pw in range(order):
            tay = tay + xp @ C[:, :, pw].T
            xp = xp * h
        h = base + tay + b[None, :]
    return h.reshape(*orig_shape[:-1], h.shape[-1])


# ----------------------------------- main ------------------------------------

if __name__ == "__main__":
    ORDER = 3
    layers_hidden = [32, 64, 32]

    key = jax.random.PRNGKey(0)
    kx, kp = jax.random.split(key)

    # input: (batch=2, seq=8, in_features=32)
    x = jax.random.normal(kx, (2, 8, layers_hidden[0]), jnp.float32)

    raw_params = init_taylor_kan_params(kp, layers_hidden, ORDER,
                                        scale_base=0.5, scale_taylor=0.3)
    kernel_params = prepare_kernel_params(raw_params, ORDER)

    out = taylor_kan_forward(x, kernel_params, order=ORDER)
    out = jax.block_until_ready(out)

    ref = taylor_kan_forward_ref(x, raw_params, order=ORDER)
    assert out.shape == (2, 8, layers_hidden[-1])
    # bf16 MXU operands vs f32 reference -> loosened tolerance
    assert jnp.allclose(out, ref, atol=2e-2, rtol=2e-2), \
        f"max err {jnp.max(jnp.abs(out - ref))}"

    print("KERNEL_OK")
</pallas_src>

<mosaic_0001>
module attributes {stable_mosaic.version = 11 : i64} {
  func.func @_taylor_kan_net_kernel(%arg0: i32, %arg1: memref<8x32xf32, #tpu.memory_space<vmem>>, %arg2: memref<96x64xbf16, #tpu.memory_space<vmem>>, %arg3: memref<1x64xf32, #tpu.memory_space<vmem>>, %arg4: memref<192x32xbf16, #tpu.memory_space<vmem>>, %arg5: memref<1x32xf32, #tpu.memory_space<vmem>>, %arg6: memref<8x32xf32, #tpu.memory_space<vmem>>) attributes {dimension_semantics = [#tpu.dimension_semantics<parallel>], iteration_bounds = array<i64: 2>, scalar_prefetch = 0 : i64, scratch_operands = 0 : i64, tpu.core_type = #tpu.core_type<tc>, window_params = [{transform_indices = @transform_0, window_bounds = array<i64: 8, 32>}, {pipeline_mode = #tpu.pipeline_mode<synchronous>, transform_indices = @transform_1, window_bounds = array<i64: 96, 64>}, {pipeline_mode = #tpu.pipeline_mode<synchronous>, transform_indices = @transform_2, window_bounds = array<i64: 1, 64>}, {pipeline_mode = #tpu.pipeline_mode<synchronous>, transform_indices = @transform_3, window_bounds = array<i64: 192, 32>}, {pipeline_mode = #tpu.pipeline_mode<synchronous>, transform_indices = @transform_4, window_bounds = array<i64: 1, 32>}, {transform_indices = @transform_5, window_bounds = array<i64: 8, 32>}]} {
    %c0 = arith.constant 0 : index
    %c0_0 = arith.constant 0 : index
    %0 = vector.load %arg1[%c0, %c0_0] : memref<8x32xf32, #tpu.memory_space<vmem>>, vector<8x32xf32>
    %1 = arith.negf %0 : vector<8x32xf32>
    %2 = math.exp %1 : vector<8x32xf32>
    %cst = arith.constant 1.000000e+00 : f32
    %3 = vector.broadcast %cst : f32 to vector<8x32xf32>
    %4 = arith.addf %3, %2 : vector<8x32xf32>
    %5 = arith.divf %3, %4 : vector<8x32xf32>
    %6 = arith.mulf %0, %5 : vector<8x32xf32>
    %7 = arith.truncf %6 : vector<8x32xf32> to vector<8x32xbf16>
    %8 = arith.truncf %0 : vector<8x32xf32> to vector<8x32xbf16>
    %9 = arith.mulf %0, %0 : vector<8x32xf32>
    %10 = arith.truncf %9 : vector<8x32xf32> to vector<8x32xbf16>
    %11 = tpu.concatenate %7, %8, %10 in 1 : vector<8x32xbf16>, vector<8x32xbf16>, vector<8x32xbf16> -> vector<8x96xbf16>
    %c0_1 = arith.constant 0 : index
    %c0_2 = arith.constant 0 : index
    %12 = vector.load %arg2[%c0_1, %c0_2] : memref<96x64xbf16, #tpu.memory_space<vmem>>, vector<96x64xbf16>
    %cst_3 = arith.constant dense<0.000000e+00> : vector<8x64xf32>
    %13 = tpu.matmul %11, %12, %cst_3 {dimension_numbers = #tpu.dot_dimension_numbers<[1], [0], [0], [1], [0, 0, 1, 1], [], []>} : vector<8x96xbf16>, vector<96x64xbf16>, vector<8x64xf32> -> vector<8x64xf32>
    %c0_4 = arith.constant 0 : index
    %c0_5 = arith.constant 0 : index
    %14 = vector.load %arg3[%c0_4, %c0_5] : memref<1x64xf32, #tpu.memory_space<vmem>>, vector<1x64xf32>
    %15 = vector.broadcast %14 : vector<1x64xf32> to vector<8x64xf32>
    %16 = arith.addf %13, %15 : vector<8x64xf32>
    %17 = arith.negf %16 : vector<8x64xf32>
    %18 = math.exp %17 : vector<8x64xf32>
    %cst_6 = arith.constant 1.000000e+00 : f32
    %19 = vector.broadcast %cst_6 : f32 to vector<8x64xf32>
    %20 = arith.addf %19, %18 : vector<8x64xf32>
    %21 = arith.divf %19, %20 : vector<8x64xf32>
    %22 = arith.mulf %16, %21 : vector<8x64xf32>
    %23 = arith.truncf %22 : vector<8x64xf32> to vector<8x64xbf16>
    %24 = arith.truncf %16 : vector<8x64xf32> to vector<8x64xbf16>
    %25 = arith.mulf %16, %16 : vector<8x64xf32>
    %26 = arith.truncf %25 : vector<8x64xf32> to vector<8x64xbf16>
    %27 = tpu.concatenate %23, %24, %26 in 1 : vector<8x64xbf16>, vector<8x64xbf16>, vector<8x64xbf16> -> vector<8x192xbf16>
    %c0_7 = arith.constant 0 : index
    %c0_8 = arith.constant 0 : index
    %28 = vector.load %arg4[%c0_7, %c0_8] : memref<192x32xbf16, #tpu.memory_space<vmem>>, vector<192x32xbf16>
    %cst_9 = arith.constant dense<0.000000e+00> : vector<8x32xf32>
    %29 = tpu.matmul %27, %28, %cst_9 {dimension_numbers = #tpu.dot_dimension_numbers<[1], [0], [0], [1], [0, 0, 1, 1], [], []>} : vector<8x192xbf16>, vector<192x32xbf16>, vector<8x32xf32> -> vector<8x32xf32>
    %c0_10 = arith.constant 0 : index
    %c0_11 = arith.constant 0 : index
    %30 = vector.load %arg5[%c0_10, %c0_11] : memref<1x32xf32, #tpu.memory_space<vmem>>, vector<1x32xf32>
    %31 = vector.broadcast %30 : vector<1x32xf32> to vector<8x32xf32>
    %32 = arith.addf %29, %31 : vector<8x32xf32>
    %c0_12 = arith.constant 0 : index
    %c0_13 = arith.constant 0 : index
    %33 = vector.load %arg6[%c0_12, %c0_13] : memref<8x32xf32, #tpu.memory_space<vmem>>, vector<8x32xf32>
    tpu.vector_store %arg6[%c0_12, %c0_13], %32 {strides = array<i32>} : memref<8x32xf32, #tpu.memory_space<vmem>>, vector<8x32xf32>,
    return
  }
  func.func @transform_0(%arg0: i32) -> (i32, i32) {
    %c0_i32 = arith.constant 0 : i32
    %c0_i32_0 = arith.constant 0 : i32
    return %arg0, %c0_i32 : i32, i32
  }
  func.func @transform_1(%arg0: i32) -> (i32, i32) {
    %c0_i32 = arith.constant 0 : i32
    %c0_i32_0 = arith.constant 0 : i32
    %c0_i32_1 = arith.constant 0 : i32
    return %c0_i32, %c0_i32_0 : i32, i32
  }
  func.func @transform_2(%arg0: i32) -> (i32, i32) {
    %c0_i32 = arith.constant 0 : i32
    %c0_i32_0 = arith.constant 0 : i32
    %c0_i32_1 = arith.constant 0 : i32
    return %c0_i32, %c0_i32_0 : i32, i32
  }
  func.func @transform_3(%arg0: i32) -> (i32, i32) {
    %c0_i32 = arith.constant 0 : i32
    %c0_i32_0 = arith.constant 0 : i32
    %c0_i32_1 = arith.constant 0 : i32
    return %c0_i32, %c0_i32_0 : i32, i32
  }
  func.func @transform_4(%arg0: i32) -> (i32, i32) {
    %c0_i32 = arith.constant 0 : i32
    %c0_i32_0 = arith.constant 0 : i32
    %c0_i32_1 = arith.constant 0 : i32
    return %c0_i32, %c0_i32_0 : i32, i32
  }
  func.func @transform_5(%arg0: i32) -> (i32, i32) {
    %c0_i32 = arith.constant 0 : i32
    %c0_i32_0 = arith.constant 0 : i32
    return %arg0, %c0_i32 : i32, i32
  }
}

</mosaic_0001>

<llo_original>
// kernel: tpu_custom_call.1
$region0: #{tpu_custom_call.1}
  #allocation0 [shape = 'u32[]', space=smem, size = 0x4, offset = 0x4, fixed_abs, tag = 'smem constant byte address 0x4 - core index']
  #allocation1 [shape = 'u32[72,128]{1,0:T(1,128)}', space=vmem, size = 0x9000, scoped, tag = 'internal scratch']
  %s0 = inlined_call_operand.vmem [shape: f32[16,32], index: 0, kind: input, shape index: {}]
  %s1 = inlined_call_operand.vmem [shape: bf16[96,64], index: 1, kind: input, shape index: {}]
  %s2 = inlined_call_operand.vmem [shape: f32[1,64], index: 2, kind: input, shape index: {}]
  %s3 = inlined_call_operand.vmem [shape: bf16[192,32], index: 3, kind: input, shape index: {}]
  %s4 = inlined_call_operand.vmem [shape: f32[1,32], index: 4, kind: input, shape index: {}]
  %s5 = inlined_call_operand.hbm [shape: f32[16,32], index: 5, kind: output, shape index: {}]
  %s6 = sld [smem:[#allocation0]]
  $region53: #{tpu_custom_call.1} parent=0
    _
  %s8 = ssub.s32 1, %s6
  %s9 = scalar_select 0, %s8, %s6
  $region1: #{tpu_custom_call.1} parent=0
    #allocation2 [shape = 'u8[8192]{0}', space=vmem, size = 0x2000, scoped, tag = 'output window, operand 0']
    #allocation3 [shape = 's32[2]{0}', space=sflag, size = 0x8, scoped, tag = 'scoped memory for tpu_custom_call.1']
    %10 = vsyncpa [#allocation3], 0
    %s11 = scalar_lea.sflag [#allocation3], 1
    %12 = vsyncpa %s11, 0
    loop: start=0, step=1, limit=4
    $region2: #{tpu_custom_call.1} parent=1 // loop_pre_header
      _
    $region3: #{tpu_custom_call.1} parent=1 // loop_header
      %s14 = sphi 0, %s18
      %p15 = scmp.ge.s32.totalorder %s14, 4
      %s24 = sphi 0, %s26
      %s27 = sphi 0, %s24
      %s28 = sphi 0, %s27
      %s44 = sphi 0, %s28
      %s48 = sphi 0, %s48
      %s50 = sphi 0, %s48
      %s51 = sphi 0, %s50
      %s65 = sphi 0, %s51
      %s69 = sphi 0, %s69
      %s71 = sphi 0, %s69
      %s72 = sphi 0, %s71
      %s86 = sphi 0, %s72
      %s90 = sphi 0, %s90
      %s92 = sphi 0, %s90
      %s93 = sphi 0, %s92
      %s107 = sphi 0, %s93
      %s111 = sphi 0, %s111
      %s113 = sphi 0, %s111
      %s114 = sphi 0, %s113
      %s128 = sphi 0, %s114
      %s134 = sphi 0, %s136
      %s137 = sphi 0, %s134
      %s138 = sphi 0, %s137
      %s154 = sphi 0, %s138
    $region4: #{tpu_custom_call.1} parent=1 // loop_header_branch
      %17 = sbr.rel (%p15) target = $region8
    $region5: #{tpu_custom_call.1} parent=1 // loop_body
      %s19 = ssub.s32 %s14, 1
      %s20 = ssub.s32 %s14, 2
      %s21 = sadd.s32 %s14, 1
      %s22 = ssub.s32 %s14, %s21
      %p23 = scmp.eq.s32.totalorder %s22, 0
      %s25 = sadd.s32 %s24, 1
      %s26 = scalar_select %p23, %s24, %s25
      %p29 = pneg %p23
      %p30 = scmp.eq.s32.totalorder %s14, 1
      %p31 = por %p29, %p30
      %p32 = scmp.ne.s32.totalorder %s24, %s27
      %p33 = scmp.eq.s32.totalorder %s14, 0
      %p34 = por %p32, %p33
      %p35 = scmp.ne.s32.totalorder %s24, %s27
      %p36 = scmp.eq.s32.totalorder %s19, 1
      %p37 = por %p35, %p36
      %p38 = scmp.ne.s32.totalorder %s27, %s28
      %p39 = scmp.eq.s32.totalorder %s19, 0
      %p40 = por %p38, %p39
      %p41 = scmp.ne.s32.totalorder %s27, %s28
      %p42 = scmp.eq.s32.totalorder %s20, 1
      %p43 = por %p41, %p42
      %p45 = scmp.ne.s32.totalorder %s28, %s44
      %p46 = scmp.eq.s32.totalorder %s20, 0
      %p47 = por %p45, %p46
      %s49 = sadd.s32 %s48, 1
      %p52 = scmp.eq.s32.totalorder %s14, 1
      %p53 = scmp.ne.s32.totalorder %s48, %s50
      %p54 = scmp.eq.s32.totalorder %s14, 0
      %p55 = por %p53, %p54
      %p56 = scmp.ne.s32.totalorder %s48, %s50
      %p57 = scmp.eq.s32.totalorder %s19, 1
      %p58 = por %p56, %p57
      %p59 = scmp.ne.s32.totalorder %s50, %s51
      %p60 = scmp.eq.s32.totalorder %s19, 0
      %p61 = por %p59, %p60
      %p62 = scmp.ne.s32.totalorder %s50, %s51
      %p63 = scmp.eq.s32.totalorder %s20, 1
      %p64 = por %p62, %p63
      %p66 = scmp.ne.s32.totalorder %s51, %s65
      %p67 = scmp.eq.s32.totalorder %s20, 0
      %p68 = por %p66, %p67
      %s70 = sadd.s32 %s69, 1
      %p73 = scmp.eq.s32.totalorder %s14, 1
      %p74 = scmp.ne.s32.totalorder %s69, %s71
      %p75 = scmp.eq.s32.totalorder %s14, 0
      %p76 = por %p74, %p75
      %p77 = scmp.ne.s32.totalorder %s69, %s71
      %p78 = scmp.eq.s32.totalorder %s19, 1
      %p79 = por %p77, %p78
      %p80 = scmp.ne.s32.totalorder %s71, %s72
      %p81 = scmp.eq.s32.totalorder %s19, 0
      %p82 = por %p80, %p81
      %p83 = scmp.ne.s32.totalorder %s71, %s72
      %p84 = scmp.eq.s32.totalorder %s20, 1
      %p85 = por %p83, %p84
      %p87 = scmp.ne.s32.totalorder %s72, %s86
      %p88 = scmp.eq.s32.totalorder %s20, 0
      %p89 = por %p87, %p88
      %s91 = sadd.s32 %s90, 1
      %p94 = scmp.eq.s32.totalorder %s14, 1
      %p95 = scmp.ne.s32.totalorder %s90, %s92
      %p96 = scmp.eq.s32.totalorder %s14, 0
      %p97 = por %p95, %p96
      %p98 = scmp.ne.s32.totalorder %s90, %s92
      %p99 = scmp.eq.s32.totalorder %s19, 1
      %p100 = por %p98, %p99
      %p101 = scmp.ne.s32.totalorder %s92, %s93
      %p102 = scmp.eq.s32.totalorder %s19, 0
      %p103 = por %p101, %p102
      %p104 = scmp.ne.s32.totalorder %s92, %s93
      %p105 = scmp.eq.s32.totalorder %s20, 1
      %p106 = por %p104, %p105
      %p108 = scmp.ne.s32.totalorder %s93, %s107
      %p109 = scmp.eq.s32.totalorder %s20, 0
      %p110 = por %p108, %p109
      %s112 = sadd.s32 %s111, 1
      %p115 = scmp.eq.s32.totalorder %s14, 1
      %p116 = scmp.ne.s32.totalorder %s111, %s113
      %p117 = scmp.eq.s32.totalorder %s14, 0
      %p118 = por %p116, %p117
      %p119 = scmp.ne.s32.totalorder %s111, %s113
      %p120 = scmp.eq.s32.totalorder %s19, 1
      %p121 = por %p119, %p120
      %p122 = scmp.ne.s32.totalorder %s113, %s114
      %p123 = scmp.eq.s32.totalorder %s19, 0
      %p124 = por %p122, %p123
      %p125 = scmp.ne.s32.totalorder %s113, %s114
      %p126 = scmp.eq.s32.totalorder %s20, 1
      %p127 = por %p125, %p126
      %p129 = scmp.ne.s32.totalorder %s114, %s128
      %p130 = scmp.eq.s32.totalorder %s20, 0
      %p131 = por %p129, %p130
      %s132 = ssub.s32 %s14, %s21
      %p133 = scmp.eq.s32.totalorder %s132, 0
      %s135 = sadd.s32 %s134, 1
      %s136 = scalar_select %p133, %s134, %s135
      %p139 = pneg %p133
      %p140 = scmp.eq.s32.totalorder %s14, 1
      %p141 = por %p139, %p140
      %p142 = scmp.ne.s32.totalorder %s134, %s137
      %p143 = scmp.eq.s32.totalorder %s14, 0
      %p144 = por %p142, %p143
      %p145 = scmp.ne.s32.totalorder %s134, %s137
      %p146 = scmp.eq.s32.totalorder %s19, 1
      %p147 = por %p145, %p146
      %p148 = scmp.ne.s32.totalorder %s137, %s138
      %p149 = scmp.eq.s32.totalorder %s19, 0
      %p150 = por %p148, %p149
      %p151 = scmp.ne.s32.totalorder %s137, %s138
      %p152 = scmp.eq.s32.totalorder %s20, 1
      %p153 = por %p151, %p152
      %p155 = scmp.ne.s32.totalorder %s138, %s154
      %p156 = scmp.eq.s32.totalorder %s20, 0
      %p157 = por %p155, %p156
      %p158 = scmp.le.s32.totalorder 1, %s14
      %p159 = scmp.lt.s32.totalorder %s14, 3
      %p160 = pnand %p158, %p159
      %p161 = pneg %p160
      // Predicated region
      $region9: #{tpu_custom_call.1} parent=5 // pred_check
        _
      $region10: #{tpu_custom_call.1} parent=5 // pred_check_branch
        %163 = sbr.rel (%p160) target = $region12
      $region11: #{tpu_custom_call.1} parent=5 // pred_region
        %s164 = ssub.s32 %s14, 1
        // Predicated region
        $region13: #{tpu_custom_call.1} parent=11 // pred_check
          %p165 = pneg %p61
        $region14: #{tpu_custom_call.1} parent=11 // pred_check_branch
          %167 = sbr.rel (%p165) target = $region16
        $region15: #{tpu_custom_call.1} parent=11 // pred_region
          _
        $region16: #{tpu_custom_call.1} parent=11 // pred_fallthru
          _
        // Predicated region
        $region17: #{tpu_custom_call.1} parent=11 // pred_check
          %p168 = pneg %p82
        $region18: #{tpu_custom_call.1} parent=11 // pred_check_branch
          %170 = sbr.rel (%p168) target = $region20
        $region19: #{tpu_custom_call.1} parent=11 // pred_region
          _
        $region20: #{tpu_custom_call.1} parent=11 // pred_fallthru
          _
        // Predicated region
        $region21: #{tpu_custom_call.1} parent=11 // pred_check
          %p171 = pneg %p103
        $region22: #{tpu_custom_call.1} parent=11 // pred_check_branch
          %173 = sbr.rel (%p171) target = $region24
        $region23: #{tpu_custom_call.1} parent=11 // pred_region
          _
        $region24: #{tpu_custom_call.1} parent=11 // pred_fallthru
          _
        // Predicated region
        $region25: #{tpu_custom_call.1} parent=11 // pred_check
          %p174 = pneg %p124
        $region26: #{tpu_custom_call.1} parent=11 // pred_check_branch
          %176 = sbr.rel (%p174) target = $region28
        $region27: #{tpu_custom_call.1} parent=11 // pred_region
          _
        $region28: #{tpu_custom_call.1} parent=11 // pred_fallthru
          _
      $region12: #{tpu_custom_call.1} parent=5 // pred_fallthru
        _
      %p177 = scmp.lt.s32.totalorder %s14, 2
      // Predicated region
      $region29: #{tpu_custom_call.1} parent=5 // pred_check
        %p178 = pneg %p177
      $region30: #{tpu_custom_call.1} parent=5 // pred_check_branch
        %180 = sbr.rel (%p178) target = $region32
      $region31: #{tpu_custom_call.1} parent=5 // pred_region
        // Predicated region
        $region33: #{tpu_custom_call.1} parent=31 // pred_check
          %p181 = pneg %p34
        $region34: #{tpu_custom_call.1} parent=31 // pred_check_branch
          %183 = sbr.rel (%p181) target = $region36
        $region35: #{tpu_custom_call.1} parent=31 // pred_region
          %p184 = scmp.lt.s32.totalorder %s14, 1
          %s185 = scalar_select %p184, %s14, 1
          %s186 = smul.addr %s185, 8
          %s187 = scalar_lea.vmem %s0, %s186
        $region36: #{tpu_custom_call.1} parent=31 // pred_fallthru
          _
      $region32: #{tpu_custom_call.1} parent=5 // pred_fallthru
        _
      %p188 = scmp.le.s32.totalorder 1, %s14
      %p189 = scmp.lt.s32.totalorder %s14, 3
      %p190 = pnand %p188, %p189
      %p191 = pneg %p190
      // Predicated region
      $region37: #{tpu_custom_call.1} parent=5 // pred_check
        _
      $region38: #{tpu_custom_call.1} parent=5 // pred_check_branch
        %193 = sbr.rel (%p190) target = $region40
      $region39: #{tpu_custom_call.1} parent=5 // pred_region
        %s194 = ssub.s32 %s14, 1
        %p195 = scmp.lt.s32.totalorder %s19, 1
        %s196 = scalar_select %p195, %s19, 1
        %s197 = smul.addr %s196, 8
        %s198 = scalar_lea.vmem %s0, %s197
        %p199 = pneg %p40
        %p200 = pneg %p37
        %p201 = pneg %p61
        %p202 = pneg %p58
        %p203 = pneg %p82
        %p204 = pneg %p79
        %p205 = pneg %p103
        %p206 = pneg %p100
        %p207 = pneg %p124
        %p208 = pneg %p121
        %p209 = pneg %p150
        %p210 = pneg %p147
        %s211 = sand.u32 %s137, 1
        %s212 = scalar_lea.sflag [#allocation3], %s211
        %s213 = sand.u32 %s137, 1
        %s214 = smul.addr %s213, 8
        %s215 = scalar_lea.vmem [#allocation2], %s214
        %p216 = scmp.lt.s32.totalorder %s19, 1
        %s217 = scalar_select %p216, %s19, 1
        %s218 = smul.addr %s217, 8
        %s219 = scalar_lea.vmem %s0, %s218
        %v221 = vld [vmem:[%s219] sm:$0xff]
        %v222 = vxor.u32 %v221, 2147483648
        %v223 = vmul.f32 %v222, 1.442695
        %v224 = vpow.pop %v223
        %v225 = vadd.f32 %v224, 1.0
        %v226 = vrcp.pop %v225
        %v227 = vmul.f32 %v225, %v226
        %v228 = vsub.f32 1.0, %v227
        %v229 = vmul.f32 %v226, %v228
        %v230 = vadd.f32 %v226, %v229
        %vm231 = vweird.f32 %v225
        %vm232 = vweird.f32 %v226
        %vm233 = vmor %vm231, %vm232
        %v234 = vsel %vm233, %v226, %v230
        %v235 = vand.u32 2147483647, %v225
        %vm236 = vcmp.eq.f32.partialorder %v235, 8.507059e+37
        %v237 = vand.u32 %v225, 2147483648
        %v238 = vor.u32 1.1754944e-38, %v237
        %v239 = vsel %vm236, %v238, %v234
        %v240 = vmul.f32 1.0, %v239
        %v241 = vmul.f32 %v221, %v240
        %v242 = vpack.c.bf16 %v241, %v241
        %v243 = vpack.c.bf16 %v221, %v221
        %v244 = vmul.f32 %v221, %v221
        %v245 = vpack.c.bf16 %v244, %v244
        %v247 = vunpack.c.l.b16 %v243
        %v248 = vpack.c.b16 %v247, %v247
        %249 = vrot.lane.b32.xlu0 %v248, 32
        %v250 = vpop.permute.xlu0 %249
        %v252 = vunpack.c.l.b16 %v245
        %v253 = vpack.c.b16 %v252, %v252
        %254 = vrot.lane.b32.xlu0 %v253, 64
        %v255 = vpop.permute.xlu0 %254
        %vm256 = vcmask 261120
        %v259 = vsel %vm256, %v242, %v250
        %vm260 = vcmask 523264
        %v262 = vsel %vm260, %v259, %v255
        %v263 = vld [vmem:[%s1] sm:$0xf]
        %v264 = vld [vmem:[%s1 + $0x4] sm:$0xf]
        %v265 = vld [vmem:[%s1 + $0x8] sm:$0xf]
        %v266 = vld [vmem:[%s1 + $0xc] sm:$0xf]
        %v267 = vld [vmem:[%s1 + $0x10] sm:$0xf]
        %v268 = vld [vmem:[%s1 + $0x14] sm:$0xf]
        %v269 = vld [vmem:[%s1 + $0x18] sm:$0xf]
        %v270 = vld [vmem:[%s1 + $0x1c] sm:$0xf]
        %v271 = vld [vmem:[%s1 + $0x20] sm:$0xf]
        %v272 = vld [vmem:[%s1 + $0x24] sm:$0xf]
        %v273 = vld [vmem:[%s1 + $0x28] sm:$0xf]
        %v274 = vld [vmem:[%s1 + $0x2c] sm:$0xf]
        %v275 = vld [vmem:[%s2] sm:$0x1]
        %v277 = vperm.slane %v275, 0
        %v291 = vunpack.c.l.b16 %v263
        %v292 = vunpack.c.l.b16 %v264
        %v293 = vunpack.c.l.b16 %v265
        %v294 = vunpack.c.l.b16 %v266
        %v295 = vunpack.c.l.b16 %v267
        %v296 = vunpack.c.l.b16 %v268
        %v297 = vunpack.c.l.b16 %v269
        %v298 = vunpack.c.l.b16 %v270
        %v299 = vunpack.c.l.b16 %v271
        %v300 = vunpack.c.l.b16 %v272
        %v301 = vunpack.c.l.b16 %v273
        %v302 = vunpack.c.l.b16 %v274
        %v303 = vpack.c.b16 %v292, %v291
        %v304 = vpack.c.b16 %v294, %v293
        %v305 = vpack.c.b16 %v296, %v295
        %v306 = vpack.c.b16 %v298, %v297
        %v307 = vpack.c.b16 %v300, %v299
        %v308 = vpack.c.b16 %v302, %v301
        %vm315 = vcmask 785408
        %v316 = vsel %vm315, %v262, 0
        %318 = vmatpush.bf16.msra.mxu0 0
        %319 = vmatpush.bf16.msra.mxu0 0
        %320 = vmatpush.bf16.msra.mxu0 %v308
        %321 = vmatpush.bf16.msra.mxu0 %v307
        %322 = vmatpush.bf16.msra.mxu0 %v306
        %323 = vmatpush.bf16.msra.mxu0 %v305
        %324 = vmatpush.bf16.msra.mxu0 %v304
        %325 = vmatpush.bf16.msra.mxu0 %v303
        %326 = vmatmul.bf16.gmra.mxu0 %v316
        %v327 = vpop.f32.mrf.mxu0
        %v328 = vadd.f32 %v277, %v327
        %v329 = vpop.f32.mrf.mxu0
        %330 = vdwg.mxu0
        %v331 = vxor.u32 %v328, 2147483648
        %v332 = vmul.f32 %v331, 1.442695
        %v333 = vpow.pop %v332
        %v334 = vadd.f32 %v333, 1.0
        %v335 = vrcp.pop %v334
        %v336 = vmul.f32 %v334, %v335
        %v337 = vsub.f32 1.0, %v336
        %v338 = vmul.f32 %v335, %v337
        %v339 = vadd.f32 %v335, %v338
        %vm340 = vweird.f32 %v334
        %vm341 = vweird.f32 %v335
        %vm342 = vmor %vm340, %vm341
        %v343 = vsel %vm342, %v335, %v339
        %v344 = vand.u32 2147483647, %v334
        %vm345 = vcmp.eq.f32.partialorder %v344, 8.507059e+37
        %v346 = vand.u32 %v334, 2147483648
        %v347 = vor.u32 1.1754944e-38, %v346
        %v348 = vsel %vm345, %v347, %v343
        %v349 = vmul.f32 1.0, %v348
        %v350 = vmul.f32 %v328, %v349
        %v351 = vpack.c.bf16 %v350, %v350
        %v352 = vpack.c.bf16 %v328, %v328
        %v353 = vmul.f32 %v328, %v328
        %v354 = vpack.c.bf16 %v353, %v353
        %v356 = vunpack.c.l.b16 %v352
        %v357 = vpack.c.b16 %v356, %v356
        %358 = vrot.lane.b32.xlu0 %v357, 64
        %v359 = vpop.permute.xlu0 %358
        %v362 = vsel %vm260, %v351, %v359
        %v364 = vld [vmem:[%s3] sm:$0xf]
        %v365 = vld [vmem:[%s3 + $0x4] sm:$0xf]
        %v366 = vld [vmem:[%s3 + $0x8] sm:$0xf]
        %v367 = vld [vmem:[%s3 + $0xc] sm:$0xf]
        %v368 = vld [vmem:[%s3 + $0x10] sm:$0xf]
        %v369 = vld [vmem:[%s3 + $0x14] sm:$0xf]
        %v370 = vld [vmem:[%s3 + $0x18] sm:$0xf]
        %v371 = vld [vmem:[%s3 + $0x1c] sm:$0xf]
        %v372 = vld [vmem:[%s3 + $0x20] sm:$0xf]
        %v373 = vld [vmem:[%s3 + $0x24] sm:$0xf]
        %v374 = vld [vmem:[%s3 + $0x28] sm:$0xf]
        %v375 = vld [vmem:[%s3 + $0x2c] sm:$0xf]
        %v376 = vld [vmem:[%s3 + $0x30] sm:$0xf]
        %v377 = vld [vmem:[%s3 + $0x34] sm:$0xf]
        %v378 = vld [vmem:[%s3 + $0x38] sm:$0xf]
        %v379 = vld [vmem:[%s3 + $0x3c] sm:$0xf]
        %v380 = vld [vmem:[%s3 + $0x40] sm:$0xf]
        %v381 = vld [vmem:[%s3 + $0x44] sm:$0xf]
        %v382 = vld [vmem:[%s3 + $0x48] sm:$0xf]
        %v383 = vld [vmem:[%s3 + $0x4c] sm:$0xf]
        %v384 = vld [vmem:[%s3 + $0x50] sm:$0xf]
        %v385 = vld [vmem:[%s3 + $0x54] sm:$0xf]
        %v386 = vld [vmem:[%s3 + $0x58] sm:$0xf]
        %v387 = vld [vmem:[%s3 + $0x5c] sm:$0xf]
        %v388 = vld [vmem:[%s4] sm:$0x1]
        %v390 = vperm.slane %v388, 0
        %v416 = vunpack.c.l.b16 %v364
        %v417 = vunpack.c.l.b16 %v365
        %v418 = vunpack.c.l.b16 %v366
        %v419 = vunpack.c.l.b16 %v367
        %v420 = vunpack.c.l.b16 %v368
        %v421 = vunpack.c.l.b16 %v369
        %v422 = vunpack.c.l.b16 %v370
        %v423 = vunpack.c.l.b16 %v371
        %v424 = vunpack.c.l.b16 %v372
        %v425 = vunpack.c.l.b16 %v373
        %v426 = vunpack.c.l.b16 %v374
        %v427 = vunpack.c.l.b16 %v375
        %v428 = vunpack.c.l.b16 %v376
        %v429 = vunpack.c.l.b16 %v377
        %v430 = vunpack.c.l.b16 %v378
        %v431 = vunpack.c.l.b16 %v379
        %v432 = vunpack.c.l.b16 %v380
        %v433 = vunpack.c.l.b16 %v381
        %v434 = vunpack.c.l.b16 %v382
        %v435 = vunpack.c.l.b16 %v383
        %v436 = vunpack.c.l.b16 %v384
        %v437 = vunpack.c.l.b16 %v385
        %v438 = vunpack.c.l.b16 %v386
        %v439 = vunpack.c.l.b16 %v387
        %v440 = vpack.c.b16 %v417, %v416
        %v441 = vpack.c.b16 %v419, %v418
        %v442 = vpack.c.b16 %v421, %v420
        %v443 = vpack.c.b16 %v423, %v422
        %v444 = vpack.c.b16 %v425, %v424
        %v445 = vpack.c.b16 %v427, %v426
        %v446 = vpack.c.b16 %v429, %v428
        %v447 = vpack.c.b16 %v431, %v430
        %v448 = vpack.c.b16 %v433, %v432
        %v449 = vpack.c.b16 %v435, %v434
        %v450 = vpack.c.b16 %v437, %v436
        %v451 = vpack.c.b16 %v439, %v438
        %v465 = vsel %vm260, %v354, 0
        %467 = vmatpush.bf16.msra.mxu0 %v447
        %468 = vmatpush.bf16.msra.mxu0 %v446
        %469 = vmatpush.bf16.msra.mxu0 %v445
        %470 = vmatpush.bf16.msra.mxu0 %v444
        %471 = vmatpush.bf16.msra.mxu0 %v443
        %472 = vmatpush.bf16.msra.mxu0 %v442
        %473 = vmatpush.bf16.msra.mxu0 %v441
        %474 = vmatpush.bf16.msra.mxu0 %v440
        %475 = vmatmul.bf16.gmra.mxu0 %v362
        %v476 = vpop.f32.mrf.mxu0
        %v477 = vadd.f32 %v390, %v476
        %v478 = vpop.f32.mrf.mxu0
        %479 = vdwg.mxu0
        %480 = vmatpush.bf16.msra.mxu0 0
        %481 = vmatpush.bf16.msra.mxu0 0
        %482 = vmatpush.bf16.msra.mxu0 0
        %483 = vmatpush.bf16.msra.mxu0 0
        %484 = vmatpush.bf16.msra.mxu0 %v451
        %485 = vmatpush.bf16.msra.mxu0 %v450
        %486 = vmatpush.bf16.msra.mxu0 %v449
        %487 = vmatpush.bf16.msra.mxu0 %v448
        %488 = vmatmul.bf16.gmra.mxu0 %v465
        %v489 = vpop.f32.mrf.mxu0
        %v490 = vadd.f32 %v477, %v489
        %v491 = vpop.f32.mrf.mxu0
        %492 = vdwg.mxu0
        %493 = vst.msk [vmem:[%s215] sm:$0xff] %vm256, %v490
        %s494 = sand.u32 %s137, 1
        %s495 = scalar_lea.sflag [#allocation3], %s494
        %s496 = sand.u32 %s137, 1
        %s497 = smul.addr %s496, 8
        %s498 = scalar_lea.vmem [#allocation2], %s497
        // Predicated region
        $region41: #{tpu_custom_call.1} parent=39 // pred_check
          %p499 = pneg %p147
        $region42: #{tpu_custom_call.1} parent=39 // pred_check_branch
          %501 = sbr.rel (%p499) target = $region44
        $region43: #{tpu_custom_call.1} parent=39 // pred_region
          %503 = vsyncadd %s495, 0
          %s504 = smul.addr %s19, 8
          %s505 = scalar_lea.hbm %s5, %s504
          %s507 = sshll.u32 %s498, 4
          %s508 = int_to_ptr.vmem [resolvable:$true] %s507
          %s509 = sshll.u32 %s505, 4
          %s510 = int_to_ptr.hbm [resolvable:$true] %s509
          %512 = dma.vmem_to_hbm [thread:$0]  %s508, 128, %s510, %s495
        $region44: #{tpu_custom_call.1} parent=39 // pred_fallthru
          _
      $region40: #{tpu_custom_call.1} parent=5 // pred_fallthru
        _
      %p513 = scmp.le.s32.totalorder 2, %s14
      // Predicated region
      $region45: #{tpu_custom_call.1} parent=5 // pred_check
        %p514 = pneg %p513
      $region46: #{tpu_custom_call.1} parent=5 // pred_check_branch
        %516 = sbr.rel (%p514) target = $region48
      $region47: #{tpu_custom_call.1} parent=5 // pred_region
        %s517 = ssub.s32 %s14, 2
        // Predicated region
        $region49: #{tpu_custom_call.1} parent=47 // pred_check
          %p518 = pneg %p153
        $region50: #{tpu_custom_call.1} parent=47 // pred_check_branch
          %520 = sbr.rel (%p518) target = $region52
        $region51: #{tpu_custom_call.1} parent=47 // pred_region
          %s521 = sand.u32 %s138, 1
          %s522 = scalar_lea.sflag [#allocation3], %s521
          %s523 = sand.u32 %s138, 1
          %s524 = smul.addr %s523, 8
          %s525 = scalar_lea.vmem [#allocation2], %s524
          %527 = dma.done %s522, 128
        $region52: #{tpu_custom_call.1} parent=47 // pred_fallthru
          _
      $region48: #{tpu_custom_call.1} parent=5 // pred_fallthru
        _
    $region6: #{tpu_custom_call.1} parent=1 // loop_footer
      %s18 = sadd.s32 1, %s14
    $region7: #{tpu_custom_call.1} parent=1 // loop_footer_branch
      %13 = sbr.rel target = $region3
    $region8: #{tpu_custom_call.1} parent=1 // loop_exit
      _
    %528 = vsyncpa [#allocation3], 1
    %s529 = scalar_lea.sflag [#allocation3], 1
    %530 = vsyncpa %s529, 1

</llo_original>
